<compile_context>
chip_gen: v7x
topology: tpu7x:2x2x1
jax: 0.10.0
libtpu: 0.0.40
codegen_flags: <defaults>
</compile_context>

<pallas_src>
import functools

import jax
import jax.numpy as jnp
import numpy as np
from jax.experimental import pallas as pl
from jax.experimental.pallas import tpu as pltpu

_LANE = 128


def _round_up(x, m):
    return (x + m - 1) // m * m


def _largest_tile(n, cap):
    """Largest multiple of 128 that divides n and is <= cap (n % 128 == 0)."""
    best = _LANE
    for d in range(_LANE, min(n, max(cap, _LANE)) + 1, _LANE):
        if n % d == 0:
            best = d
    return best


# --------------------------------------------------------------------------
# Kernel 1: Wh = x @ W (bf16 out),  f1 = Wh @ a1,  f2 = Wh @ a2 (f32)
# --------------------------------------------------------------------------
def _wh_kernel(x_ref, w_ref, a1_ref, a2_ref, wh_ref, f1_ref, f2_ref):
    wh = jnp.dot(x_ref[0], w_ref[...], preferred_element_type=jnp.float32)
    wh_ref[0] = wh.astype(wh_ref.dtype)
    f1_ref[0] = jnp.dot(wh, a1_ref[...], preferred_element_type=jnp.float32)
    f2_ref[0] = jnp.dot(wh, a2_ref[...], preferred_element_type=jnp.float32)


# --------------------------------------------------------------------------
# Kernel 2: masked attention + online softmax + att @ Wh  (flash-style)
# --------------------------------------------------------------------------
def _gat_attn_kernel(f1_ref, f2t_ref, adj_ref, wh_ref, o_ref,
                     m_sc, l_sc, acc_sc,
                     *, alpha, tk, n_valid, n_padded, wh_resident):
    ki = pl.program_id(2)

    @pl.when(ki == 0)
    def _():
        m_sc[...] = jnp.full_like(m_sc, -jnp.inf)
        l_sc[...] = jnp.zeros_like(l_sc)
        acc_sc[...] = jnp.zeros_like(acc_sc)

    f1 = f1_ref[0]                     # [TQ, 1]  query-side scores (f32)
    f2 = f2t_ref[0]                    # [1, TK]  key-side scores   (f32)
    e = f1 + f2                        # [TQ, TK]
    e = jnp.where(e >= 0, e, alpha * e)                       # LeakyReLU
    e = jnp.where(adj_ref[0] != 0, e, jnp.float32(-9e15))     # adjacency mask
    if n_valid != n_padded:
        # Padded key columns get exactly zero softmax weight (-inf), so the
        # degenerate "fully masked row" case matches the unpadded reference.
        key_idx = ki * tk + jax.lax.broadcasted_iota(jnp.int32, e.shape, 1)
        e = jnp.where(key_idx < n_valid, e, -jnp.inf)

    m_prev = m_sc[...]
    m_new = jnp.maximum(m_prev, e.max(axis=-1, keepdims=True))
    corr = jnp.exp(m_prev - m_new)
    p = jnp.exp(e - m_new)                                    # [TQ, TK] f32
    l_sc[...] = corr * l_sc[...] + p.sum(axis=-1, keepdims=True)

    if wh_resident:
        start = pl.multiple_of(ki * tk, tk)
        wh_blk = wh_ref[0, pl.ds(start, tk), :]               # [TK, F] bf16
    else:
        wh_blk = wh_ref[0]                                    # [TK, F] bf16
    acc_sc[...] = corr * acc_sc[...] + jnp.dot(
        p.astype(wh_blk.dtype), wh_blk, preferred_element_type=jnp.float32)
    m_sc[...] = m_new

    @pl.when(ki == pl.num_programs(2) - 1)
    def _():
        o_ref[0] = (acc_sc[...] *
                    pl.reciprocal(l_sc[...], approx=True)).astype(o_ref.dtype)


# --------------------------------------------------------------------------
# Wrapper
# --------------------------------------------------------------------------
def graph_attention(x, adj, W, a, *, alpha=0.2, dropout=0.6, training=False):
    """Pallas GAT layer (eval-mode forward of the PyTorch module).

    x:   [B, N, F_in]   float32
    adj: [B, N, N]      (entries > 0 are edges)
    W:   [F_in, F_out]  float32
    a:   [2*F_out, 1]   float32
    """
    # TODO(synk): training-mode attention dropout not implemented.
    del dropout, training

    B, N, F_in = x.shape
    F_out = W.shape[1]

    N_p = _round_up(N, _LANE)
    F_out_p = _round_up(F_out, _LANE)

    # Pad only the node axis of x (F_in stays full-extent -> no padded copy of
    # the big feature axis in HBM; Mosaic pads the contraction in VMEM).
    x_p = x if N_p == N else jnp.pad(x, ((0, 0), (0, N_p - N), (0, 0)))
    W_p = jnp.pad(W.astype(jnp.float32), ((0, 0), (0, F_out_p - F_out)))
    a_f = a.astype(jnp.float32)
    a1 = jnp.pad(a_f[:F_out], ((0, F_out_p - F_out), (0, 0)))
    a2 = jnp.pad(a_f[F_out:], ((0, F_out_p - F_out), (0, 0)))

    # Adjacency as int8: 4x smaller dominant HBM stream + 4x smaller VMEM tile.
    adj_i8 = (adj > 0).astype(jnp.int8)
    if N_p != N:
        adj_i8 = jnp.pad(adj_i8, ((0, 0), (0, N_p - N), (0, N_p - N)))

    vmem_budget = 40 << 20  # working-set target, safe on v5e/v6e/v7x

    # ---- Kernel 1 tile plan ------------------------------------------------
    TM = _largest_tile(N_p, 512)

    def _ws1(tm):
        return (2 * tm * F_in * 4            # x block (double-buffered)
                + 2 * F_in * F_out_p * 4     # W
                + 4 * F_out_p * 4            # a1, a2
                + 2 * tm * F_out_p * 2       # Wh out (bf16)
                + 4 * tm * 4                 # f1, f2 out
                + 2 * tm * F_out_p * 4)      # f32 matmul temporaries
    while _ws1(TM) > vmem_budget and TM > _LANE:
        TM = _largest_tile(N_p, TM // 2)
    vmem1 = int(min(48 << 20, max(32 << 20, _ws1(TM) + (8 << 20))))

    wh, f1, f2 = pl.pallas_call(
        _wh_kernel,
        out_shape=(
            jax.ShapeDtypeStruct((B, N_p, F_out_p), jnp.bfloat16),
            jax.ShapeDtypeStruct((B, N_p, 1), jnp.float32),
            jax.ShapeDtypeStruct((B, N_p, 1), jnp.float32),
        ),
        grid_spec=pltpu.PrefetchScalarGridSpec(
            num_scalar_prefetch=0,
            grid=(B, N_p // TM),
            in_specs=[
                pl.BlockSpec((1, TM, F_in), lambda b, i: (b, i, 0)),
                pl.BlockSpec((F_in, F_out_p), lambda b, i: (0, 0)),
                pl.BlockSpec((F_out_p, 1), lambda b, i: (0, 0)),
                pl.BlockSpec((F_out_p, 1), lambda b, i: (0, 0)),
            ],
            out_specs=[
                pl.BlockSpec((1, TM, F_out_p), lambda b, i: (b, i, 0)),
                pl.BlockSpec((1, TM, 1), lambda b, i: (b, i, 0)),
                pl.BlockSpec((1, TM, 1), lambda b, i: (b, i, 0)),
            ],
        ),
        compiler_params=pltpu.CompilerParams(
            dimension_semantics=("parallel", "parallel"),
            vmem_limit_bytes=vmem1),
    )(x_p, W_p, a1, a2)

    # Key-side scores laid out along lanes (tiny [B, N_p, 1] transpose by XLA)
    # so the attention kernel never transposes in-kernel.
    f2t = jnp.swapaxes(f2, 1, 2)   # [B, 1, N_p]

    # ---- Kernel 2 tile plan ------------------------------------------------
    TQ = _largest_tile(N_p, 512)
    TK = _largest_tile(N_p, 512)
    # v7x megacore: keep at least 2 blocks across the parallel (B, q) axes.
    if B * (N_p // TQ) < 2 and N_p > _LANE:
        TQ = _largest_tile(N_p, max(_LANE, N_p // 2))

    wh_resident = 2 * N_p * F_out_p * 2 <= (16 << 20)

    def _ws2(tq, tk, resident):
        return (2 * tq * 4 + 2 * tk * 4                       # f1, f2^T blocks
                + 2 * tq * tk * 1                             # adj (int8)
                + (2 * N_p * F_out_p * 2 if resident
                   else 2 * tk * F_out_p * 2)                 # Wh (bf16)
                + 2 * tq * F_out_p * 4                        # output block
                + 2 * tq * 4 + tq * F_out_p * 4               # scratch
                + 4 * tq * tk * 4)                            # f32 temporaries
    while _ws2(TQ, TK, wh_resident) > vmem_budget:
        if TK > _LANE:
            TK = _largest_tile(N_p, TK // 2)
        elif TQ > _LANE:
            TQ = _largest_tile(N_p, TQ // 2)
        elif wh_resident:
            wh_resident = False
        else:
            break
    vmem2 = int(min(48 << 20, max(32 << 20, _ws2(TQ, TK, wh_resident) + (8 << 20))))

    if wh_resident:
        wh_spec = pl.BlockSpec((1, N_p, F_out_p), lambda b, qi, ki: (b, 0, 0))
    else:
        wh_spec = pl.BlockSpec((1, TK, F_out_p), lambda b, qi, ki: (b, ki, 0))

    kernel = functools.partial(
        _gat_attn_kernel, alpha=float(alpha), tk=TK,
        n_valid=N, n_padded=N_p, wh_resident=wh_resident)

    h = pl.pallas_call(
        kernel,
        out_shape=jax.ShapeDtypeStruct((B, N_p, F_out_p), jnp.float32),
        grid_spec=pltpu.PrefetchScalarGridSpec(
            num_scalar_prefetch=0,
            grid=(B, N_p // TQ, N_p // TK),
            in_specs=[
                pl.BlockSpec((1, TQ, 1), lambda b, qi, ki: (b, qi, 0)),    # f1
                pl.BlockSpec((1, 1, TK), lambda b, qi, ki: (b, 0, ki)),    # f2^T
                pl.BlockSpec((1, TQ, TK), lambda b, qi, ki: (b, qi, ki)),  # adj
                wh_spec,                                                   # Wh
            ],
            out_specs=pl.BlockSpec((1, TQ, F_out_p),
                                   lambda b, qi, ki: (b, qi, 0)),
            scratch_shapes=[
                pltpu.VMEM((TQ, 1), jnp.float32),        # running max
                pltpu.VMEM((TQ, 1), jnp.float32),        # running denom
                pltpu.VMEM((TQ, F_out_p), jnp.float32),  # output accumulator
            ],
        ),
        compiler_params=pltpu.CompilerParams(
            dimension_semantics=("parallel", "parallel", "arbitrary"),
            vmem_limit_bytes=vmem2),
    )(f1, f2t, adj_i8, wh)

    return h[:, :N, :F_out]


def kaiming_uniform(key, shape, dtype=jnp.float32):
    """Mimics torch.nn.init.kaiming_uniform_ defaults (a=0, fan_in = size(1))."""
    fan_in = shape[1]
    gain = np.sqrt(2.0)
    bound = gain * np.sqrt(3.0 / fan_in)
    return jax.random.uniform(key, shape, dtype, minval=-bound, maxval=bound)


if __name__ == "__main__":
    key = jax.random.PRNGKey(0)
    k_x, k_adj, k_w, k_a = jax.random.split(key, 4)

    B, N, F_IN, F_OUT = 2, 16, 32, 32
    ALPHA = 0.2

    x = jax.random.normal(k_x, (B, N, F_IN), dtype=jnp.float32)

    # Random symmetric adjacency with self-loops (entries in {0, 1}).
    a_rand = (jax.random.uniform(k_adj, (B, N, N)) < 0.3).astype(jnp.float32)
    a_rand = jnp.maximum(a_rand, jnp.swapaxes(a_rand, 1, 2))
    adj = jnp.maximum(a_rand, jnp.eye(N, dtype=jnp.float32)[None])

    W = kaiming_uniform(k_w, (F_IN, F_OUT))
    a_vec = kaiming_uniform(k_a, (2 * F_OUT, 1))

    out = graph_attention(x, adj, W, a_vec, alpha=ALPHA, training=False)
    out = jax.block_until_ready(out)

    # Plain-JAX reference of the PyTorch forward (eval mode), all in f32.
    Wh = x @ W
    f1_ref = Wh @ a_vec[:F_OUT]                    # [B, N, 1]
    f2_ref = Wh @ a_vec[F_OUT:]                    # [B, N, 1]
    e_ref = f1_ref + jnp.swapaxes(f2_ref, 1, 2)    # [B, N, N]
    e_ref = jnp.where(e_ref >= 0, e_ref, ALPHA * e_ref)
    e_ref = jnp.where(adj > 0, e_ref, -9e15)
    attn = jax.nn.softmax(e_ref, axis=2)
    ref = attn @ Wh

    # bf16 p@Wh matmul + approx reciprocal -> slightly looser tolerance.
    np.testing.assert_allclose(np.asarray(out), np.asarray(ref),
                               rtol=2e-2, atol=2e-2)

    print("KERNEL_OK")
</pallas_src>

<mosaic_0001>
module attributes {stable_mosaic.version = 11 : i64} {
  func.func @_wh_kernel(%arg0: i32, %arg1: i32, %arg2: memref<1x128x32xf32, #tpu.memory_space<vmem>>, %arg3: memref<32x128xf32, #tpu.memory_space<vmem>>, %arg4: memref<128x1xf32, #tpu.memory_space<vmem>>, %arg5: memref<128x1xf32, #tpu.memory_space<vmem>>, %arg6: memref<1x128x128xbf16, #tpu.memory_space<vmem>>, %arg7: memref<1x128x1xf32, #tpu.memory_space<vmem>>, %arg8: memref<1x128x1xf32, #tpu.memory_space<vmem>>) attributes {dimension_semantics = [#tpu.dimension_semantics<parallel>, #tpu.dimension_semantics<parallel>], iteration_bounds = array<i64: 2, 1>, scalar_prefetch = 0 : i64, scratch_operands = 0 : i64, tpu.core_type = #tpu.core_type<tc>, window_params = [{transform_indices = @transform_0, window_bounds = array<i64: 1, 128, 32>}, {pipeline_mode = #tpu.pipeline_mode<synchronous>, transform_indices = @transform_1, window_bounds = array<i64: 32, 128>}, {pipeline_mode = #tpu.pipeline_mode<synchronous>, transform_indices = @transform_2, window_bounds = array<i64: 128, 1>}, {pipeline_mode = #tpu.pipeline_mode<synchronous>, transform_indices = @transform_3, window_bounds = array<i64: 128, 1>}, {transform_indices = @transform_4, window_bounds = array<i64: 1, 128, 128>}, {transform_indices = @transform_5, window_bounds = array<i64: 1, 128, 1>}, {transform_indices = @transform_6, window_bounds = array<i64: 1, 128, 1>}]} {
    %c0 = arith.constant 0 : index
    %c0_0 = arith.constant 0 : index
    %c0_1 = arith.constant 0 : index
    %0 = vector.load %arg2[%c0, %c0_0, %c0_1] : memref<1x128x32xf32, #tpu.memory_space<vmem>>, vector<1x128x32xf32>
    %1 = vector.shape_cast %0 : vector<1x128x32xf32> to vector<128x32xf32>
    %c0_2 = arith.constant 0 : index
    %c0_3 = arith.constant 0 : index
    %2 = vector.load %arg3[%c0_2, %c0_3] : memref<32x128xf32, #tpu.memory_space<vmem>>, vector<32x128xf32>
    %cst = arith.constant dense<0.000000e+00> : vector<128x128xf32>
    %3 = tpu.matmul %1, %2, %cst {dimension_numbers = #tpu.dot_dimension_numbers<[1], [0], [0], [1], [0, 0, 1, 1], [], []>} : vector<128x32xf32>, vector<32x128xf32>, vector<128x128xf32> -> vector<128x128xf32>
    %4 = arith.truncf %3 : vector<128x128xf32> to vector<128x128xbf16>
    %c0_4 = arith.constant 0 : index
    %c0_5 = arith.constant 0 : index
    %c0_6 = arith.constant 0 : index
    %5 = vector.load %arg6[%c0_4, %c0_5, %c0_6] : memref<1x128x128xbf16, #tpu.memory_space<vmem>>, vector<1x128x128xbf16>
    %6 = vector.shape_cast %5 : vector<1x128x128xbf16> to vector<128x128xbf16>
    %7 = vector.shape_cast %4 : vector<128x128xbf16> to vector<1x128x128xbf16>
    tpu.vector_store %arg6[%c0_4, %c0_5, %c0_6], %7 {strides = array<i32>} : memref<1x128x128xbf16, #tpu.memory_space<vmem>>, vector<1x128x128xbf16>,
    %c0_7 = arith.constant 0 : index
    %c0_8 = arith.constant 0 : index
    %8 = vector.load %arg4[%c0_7, %c0_8] : memref<128x1xf32, #tpu.memory_space<vmem>>, vector<128x1xf32>
    %cst_9 = arith.constant dense<0.000000e+00> : vector<128x1xf32>
    %9 = tpu.matmul %3, %8, %cst_9 {dimension_numbers = #tpu.dot_dimension_numbers<[1], [0], [0], [1], [0, 0, 1, 1], [], []>} : vector<128x128xf32>, vector<128x1xf32>, vector<128x1xf32> -> vector<128x1xf32>
    %c0_10 = arith.constant 0 : index
    %c0_11 = arith.constant 0 : index
    %c0_12 = arith.constant 0 : index
    %10 = vector.load %arg7[%c0_10, %c0_11, %c0_12] : memref<1x128x1xf32, #tpu.memory_space<vmem>>, vector<1x128x1xf32>
    %11 = vector.shape_cast %10 : vector<1x128x1xf32> to vector<128x1xf32>
    %12 = vector.shape_cast %9 : vector<128x1xf32> to vector<1x128x1xf32>
    tpu.vector_store %arg7[%c0_10, %c0_11, %c0_12], %12 {strides = array<i32>} : memref<1x128x1xf32, #tpu.memory_space<vmem>>, vector<1x128x1xf32>,
    %c0_13 = arith.constant 0 : index
    %c0_14 = arith.constant 0 : index
    %13 = vector.load %arg5[%c0_13, %c0_14] : memref<128x1xf32, #tpu.memory_space<vmem>>, vector<128x1xf32>
    %cst_15 = arith.constant dense<0.000000e+00> : vector<128x1xf32>
    %14 = tpu.matmul %3, %13, %cst_15 {dimension_numbers = #tpu.dot_dimension_numbers<[1], [0], [0], [1], [0, 0, 1, 1], [], []>} : vector<128x128xf32>, vector<128x1xf32>, vector<128x1xf32> -> vector<128x1xf32>
    %c0_16 = arith.constant 0 : index
    %c0_17 = arith.constant 0 : index
    %c0_18 = arith.constant 0 : index
    %15 = vector.load %arg8[%c0_16, %c0_17, %c0_18] : memref<1x128x1xf32, #tpu.memory_space<vmem>>, vector<1x128x1xf32>
    %16 = vector.shape_cast %15 : vector<1x128x1xf32> to vector<128x1xf32>
    %17 = vector.shape_cast %14 : vector<128x1xf32> to vector<1x128x1xf32>
    tpu.vector_store %arg8[%c0_16, %c0_17, %c0_18], %17 {strides = array<i32>} : memref<1x128x1xf32, #tpu.memory_space<vmem>>, vector<1x128x1xf32>,
    return
  }
  func.func @transform_0(%arg0: i32, %arg1: i32) -> (i32, i32, i32) {
    %c0_i32 = arith.constant 0 : i32
    %c0_i32_0 = arith.constant 0 : i32
    return %arg0, %arg1, %c0_i32 : i32, i32, i32
  }
  func.func @transform_1(%arg0: i32, %arg1: i32) -> (i32, i32) {
    %c0_i32 = arith.constant 0 : i32
    %c0_i32_0 = arith.constant 0 : i32
    %c0_i32_1 = arith.constant 0 : i32
    return %c0_i32, %c0_i32_0 : i32, i32
  }
  func.func @transform_2(%arg0: i32, %arg1: i32) -> (i32, i32) {
    %c0_i32 = arith.constant 0 : i32
    %c0_i32_0 = arith.constant 0 : i32
    %c0_i32_1 = arith.constant 0 : i32
    return %c0_i32, %c0_i32_0 : i32, i32
  }
  func.func @transform_3(%arg0: i32, %arg1: i32) -> (i32, i32) {
    %c0_i32 = arith.constant 0 : i32
    %c0_i32_0 = arith.constant 0 : i32
    %c0_i32_1 = arith.constant 0 : i32
    return %c0_i32, %c0_i32_0 : i32, i32
  }
  func.func @transform_4(%arg0: i32, %arg1: i32) -> (i32, i32, i32) {
    %c0_i32 = arith.constant 0 : i32
    %c0_i32_0 = arith.constant 0 : i32
    return %arg0, %arg1, %c0_i32 : i32, i32, i32
  }
  func.func @transform_5(%arg0: i32, %arg1: i32) -> (i32, i32, i32) {
    %c0_i32 = arith.constant 0 : i32
    %c0_i32_0 = arith.constant 0 : i32
    return %arg0, %arg1, %c0_i32 : i32, i32, i32
  }
  func.func @transform_6(%arg0: i32, %arg1: i32) -> (i32, i32, i32) {
    %c0_i32 = arith.constant 0 : i32
    %c0_i32_0 = arith.constant 0 : i32
    return %arg0, %arg1, %c0_i32 : i32, i32, i32
  }
}

</mosaic_0001>

<llo_original>
// kernel: tpu_custom_call.1
$region0: #{tpu_custom_call.1}
  #allocation0 [shape = 'u32[]', space=smem, size = 0x4, offset = 0x4, fixed_abs, tag = 'smem constant byte address 0x4 - core index']
  #allocation1 [shape = 'u32[144,128]{1,0:T(1,128)}', space=vmem, size = 0x12000, scoped, tag = 'internal scratch']
  %s0 = inlined_call_operand.vmem [shape: f32[2,128,32], index: 0, kind: input, shape index: {}]
  %s1 = inlined_call_operand.vmem [shape: f32[32,128], index: 1, kind: input, shape index: {}]
  %s2 = inlined_call_operand.vmem [shape: f32[128,1], index: 2, kind: input, shape index: {}]
  %s3 = inlined_call_operand.vmem [shape: f32[128,1], index: 3, kind: input, shape index: {}]
  %s4 = inlined_call_operand.hbm [shape: bf16[2,128,128], index: 4, kind: output, shape index: {0}]
  %s5 = inlined_call_operand.vmem [shape: f32[2,128,1], index: 5, kind: output, shape index: {1}]
  %s6 = inlined_call_operand.vmem [shape: f32[2,128,1], index: 6, kind: output, shape index: {2}]
  %7 = xla_tuple %s4, %s5, %s6
  %s8 = sld [smem:[#allocation0]]
  $region65: #{tpu_custom_call.1} parent=0
    _
  %s10 = ssub.s32 1, %s8
  %s11 = scalar_select 0, %s10, %s8
  $region1: #{tpu_custom_call.1} parent=0
    #allocation2 [shape = 'u8[65536]{0}', space=vmem, size = 0x10000, scoped, tag = 'output window, operand 0']
    #allocation3 [shape = 's32[2]{0}', space=sflag, size = 0x8, scoped, tag = 'scoped memory for tpu_custom_call.1']
    %12 = vsyncpa [#allocation3], 0
    %s13 = scalar_lea.sflag [#allocation3], 1
    %14 = vsyncpa %s13, 0
    loop: start=0, step=1, limit=4
    $region2: #{tpu_custom_call.1} parent=1 // loop_pre_header
      _
    $region3: #{tpu_custom_call.1} parent=1 // loop_header
      %s16 = sphi 0, %s20
      %p17 = scmp.ge.s32.totalorder %s16, 4
      %s23 = sphi 0, %s35
      %s24 = sphi 0, %s31
      %s25 = sphi 0, %s23
      %s26 = sphi 0, %s24
      %s27 = sphi 0, %s25
      %s28 = sphi 0, %s26
      %s40 = sphi 0, %s42
      %s43 = sphi 0, %s40
      %s44 = sphi 0, %s43
      %s60 = sphi 0, %s44
      %s64 = sphi 0, %s64
      %s66 = sphi 0, %s64
      %s67 = sphi 0, %s66
      %s81 = sphi 0, %s67
      %s85 = sphi 0, %s85
      %s87 = sphi 0, %s85
      %s88 = sphi 0, %s87
      %s102 = sphi 0, %s88
      %s106 = sphi 0, %s106
      %s108 = sphi 0, %s106
      %s109 = sphi 0, %s108
      %s123 = sphi 0, %s109
      %s131 = sphi 0, %s133
      %s134 = sphi 0, %s131
      %s135 = sphi 0, %s134
      %s151 = sphi 0, %s135
      %s159 = sphi 0, %s161
      %s162 = sphi 0, %s159
      %s163 = sphi 0, %s162
      %s179 = sphi 0, %s163
      %s187 = sphi 0, %s189
      %s190 = sphi 0, %s187
      %s191 = sphi 0, %s190
      %s207 = sphi 0, %s191
    $region4: #{tpu_custom_call.1} parent=1 // loop_header_branch
      %19 = sbr.rel (%p17) target = $region8
    $region5: #{tpu_custom_call.1} parent=1 // loop_body
      %s21 = ssub.s32 %s16, 1
      %s22 = ssub.s32 %s16, 2
      %s29 = sadd.s32 1, %s24
      %p30 = scmp.ge.s32.totalorder %s29, 1
      %s31 = scalar_select %p30, 0, %s29
      %s32 = sadd.s32 1, %s23
      %s33 = scalar_select %p30, %s32, %s23
      %p34 = scmp.ge.s32.totalorder %s33, 2
      %s35 = scalar_select %p34, 0, %s33
      %s36 = ssub.s32 %s23, %s35
      %s37 = ssub.s32 %s24, %s31
      %s38 = sor.u32 %s36, %s37
      %p39 = scmp.eq.s32.totalorder %s38, 0
      %s41 = sadd.s32 %s40, 1
      %s42 = scalar_select %p39, %s40, %s41
      %p45 = pneg %p39
      %p46 = scmp.eq.s32.totalorder %s16, 1
      %p47 = por %p45, %p46
      %p48 = scmp.ne.s32.totalorder %s40, %s43
      %p49 = scmp.eq.s32.totalorder %s16, 0
      %p50 = por %p48, %p49
      %p51 = scmp.ne.s32.totalorder %s40, %s43
      %p52 = scmp.eq.s32.totalorder %s21, 1
      %p53 = por %p51, %p52
      %p54 = scmp.ne.s32.totalorder %s43, %s44
      %p55 = scmp.eq.s32.totalorder %s21, 0
      %p56 = por %p54, %p55
      %p57 = scmp.ne.s32.totalorder %s43, %s44
      %p58 = scmp.eq.s32.totalorder %s22, 1
      %p59 = por %p57, %p58
      %p61 = scmp.ne.s32.totalorder %s44, %s60
      %p62 = scmp.eq.s32.totalorder %s22, 0
      %p63 = por %p61, %p62
      %s65 = sadd.s32 %s64, 1
      %p68 = scmp.eq.s32.totalorder %s16, 1
      %p69 = scmp.ne.s32.totalorder %s64, %s66
      %p70 = scmp.eq.s32.totalorder %s16, 0
      %p71 = por %p69, %p70
      %p72 = scmp.ne.s32.totalorder %s64, %s66
      %p73 = scmp.eq.s32.totalorder %s21, 1
      %p74 = por %p72, %p73
      %p75 = scmp.ne.s32.totalorder %s66, %s67
      %p76 = scmp.eq.s32.totalorder %s21, 0
      %p77 = por %p75, %p76
      %p78 = scmp.ne.s32.totalorder %s66, %s67
      %p79 = scmp.eq.s32.totalorder %s22, 1
      %p80 = por %p78, %p79
      %p82 = scmp.ne.s32.totalorder %s67, %s81
      %p83 = scmp.eq.s32.totalorder %s22, 0
      %p84 = por %p82, %p83
      %s86 = sadd.s32 %s85, 1
      %p89 = scmp.eq.s32.totalorder %s16, 1
      %p90 = scmp.ne.s32.totalorder %s85, %s87
      %p91 = scmp.eq.s32.totalorder %s16, 0
      %p92 = por %p90, %p91
      %p93 = scmp.ne.s32.totalorder %s85, %s87
      %p94 = scmp.eq.s32.totalorder %s21, 1
      %p95 = por %p93, %p94
      %p96 = scmp.ne.s32.totalorder %s87, %s88
      %p97 = scmp.eq.s32.totalorder %s21, 0
      %p98 = por %p96, %p97
      %p99 = scmp.ne.s32.totalorder %s87, %s88
      %p100 = scmp.eq.s32.totalorder %s22, 1
      %p101 = por %p99, %p100
      %p103 = scmp.ne.s32.totalorder %s88, %s102
      %p104 = scmp.eq.s32.totalorder %s22, 0
      %p105 = por %p103, %p104
      %s107 = sadd.s32 %s106, 1
      %p110 = scmp.eq.s32.totalorder %s16, 1
      %p111 = scmp.ne.s32.totalorder %s106, %s108
      %p112 = scmp.eq.s32.totalorder %s16, 0
      %p113 = por %p111, %p112
      %p114 = scmp.ne.s32.totalorder %s106, %s108
      %p115 = scmp.eq.s32.totalorder %s21, 1
      %p116 = por %p114, %p115
      %p117 = scmp.ne.s32.totalorder %s108, %s109
      %p118 = scmp.eq.s32.totalorder %s21, 0
      %p119 = por %p117, %p118
      %p120 = scmp.ne.s32.totalorder %s108, %s109
      %p121 = scmp.eq.s32.totalorder %s22, 1
      %p122 = por %p120, %p121
      %p124 = scmp.ne.s32.totalorder %s109, %s123
      %p125 = scmp.eq.s32.totalorder %s22, 0
      %p126 = por %p124, %p125
      %s127 = ssub.s32 %s23, %s35
      %s128 = ssub.s32 %s24, %s31
      %s129 = sor.u32 %s127, %s128
      %p130 = scmp.eq.s32.totalorder %s129, 0
      %s132 = sadd.s32 %s131, 1
      %s133 = scalar_select %p130, %s131, %s132
      %p136 = pneg %p130
      %p137 = scmp.eq.s32.totalorder %s16, 1
      %p138 = por %p136, %p137
      %p139 = scmp.ne.s32.totalorder %s131, %s134
      %p140 = scmp.eq.s32.totalorder %s16, 0
      %p141 = por %p139, %p140
      %p142 = scmp.ne.s32.totalorder %s131, %s134
      %p143 = scmp.eq.s32.totalorder %s21, 1
      %p144 = por %p142, %p143
      %p145 = scmp.ne.s32.totalorder %s134, %s135
      %p146 = scmp.eq.s32.totalorder %s21, 0
      %p147 = por %p145, %p146
      %p148 = scmp.ne.s32.totalorder %s134, %s135
      %p149 = scmp.eq.s32.totalorder %s22, 1
      %p150 = por %p148, %p149
      %p152 = scmp.ne.s32.totalorder %s135, %s151
      %p153 = scmp.eq.s32.totalorder %s22, 0
      %p154 = por %p152, %p153
      %s155 = ssub.s32 %s23, %s35
      %s156 = ssub.s32 %s24, %s31
      %s157 = sor.u32 %s155, %s156
      %p158 = scmp.eq.s32.totalorder %s157, 0
      %s160 = sadd.s32 %s159, 1
      %s161 = scalar_select %p158, %s159, %s160
      %p164 = pneg %p158
      %p165 = scmp.eq.s32.totalorder %s16, 1
      %p166 = por %p164, %p165
      %p167 = scmp.ne.s32.totalorder %s159, %s162
      %p168 = scmp.eq.s32.totalorder %s16, 0
      %p169 = por %p167, %p168
      %p170 = scmp.ne.s32.totalorder %s159, %s162
      %p171 = scmp.eq.s32.totalorder %s21, 1
      %p172 = por %p170, %p171
      %p173 = scmp.ne.s32.totalorder %s162, %s163
      %p174 = scmp.eq.s32.totalorder %s21, 0
      %p175 = por %p173, %p174
      %p176 = scmp.ne.s32.totalorder %s162, %s163
      %p177 = scmp.eq.s32.totalorder %s22, 1
      %p178 = por %p176, %p177
      %p180 = scmp.ne.s32.totalorder %s163, %s179
      %p181 = scmp.eq.s32.totalorder %s22, 0
      %p182 = por %p180, %p181
      %s183 = ssub.s32 %s23, %s35
      %s184 = ssub.s32 %s24, %s31
      %s185 = sor.u32 %s183, %s184
      %p186 = scmp.eq.s32.totalorder %s185, 0
      %s188 = sadd.s32 %s187, 1
      %s189 = scalar_select %p186, %s187, %s188
      %p192 = pneg %p186
      %p193 = scmp.eq.s32.totalorder %s16, 1
      %p194 = por %p192, %p193
      %p195 = scmp.ne.s32.totalorder %s187, %s190
      %p196 = scmp.eq.s32.totalorder %s16, 0
      %p197 = por %p195, %p196
      %p198 = scmp.ne.s32.totalorder %s187, %s190
      %p199 = scmp.eq.s32.totalorder %s21, 1
      %p200 = por %p198, %p199
      %p201 = scmp.ne.s32.totalorder %s190, %s191
      %p202 = scmp.eq.s32.totalorder %s21, 0
      %p203 = por %p201, %p202
      %p204 = scmp.ne.s32.totalorder %s190, %s191
      %p205 = scmp.eq.s32.totalorder %s22, 1
      %p206 = por %p204, %p205
      %p208 = scmp.ne.s32.totalorder %s191, %s207
      %p209 = scmp.eq.s32.totalorder %s22, 0
      %p210 = por %p208, %p209
      %p211 = scmp.le.s32.totalorder 1, %s16
      %p212 = scmp.lt.s32.totalorder %s16, 3
      %p213 = pnand %p211, %p212
      %p214 = pneg %p213
      // Predicated region
      $region9: #{tpu_custom_call.1} parent=5 // pred_check
        _
      $region10: #{tpu_custom_call.1} parent=5 // pred_check_branch
        %216 = sbr.rel (%p213) target = $region12
      $region11: #{tpu_custom_call.1} parent=5 // pred_region
        %s217 = ssub.s32 %s16, 1
        // Predicated region
        $region13: #{tpu_custom_call.1} parent=11 // pred_check
          %p218 = pneg %p77
        $region14: #{tpu_custom_call.1} parent=11 // pred_check_branch
          %220 = sbr.rel (%p218) target = $region16
        $region15: #{tpu_custom_call.1} parent=11 // pred_region
          _
        $region16: #{tpu_custom_call.1} parent=11 // pred_fallthru
          _
        // Predicated region
        $region17: #{tpu_custom_call.1} parent=11 // pred_check
          %p221 = pneg %p98
        $region18: #{tpu_custom_call.1} parent=11 // pred_check_branch
          %223 = sbr.rel (%p221) target = $region20
        $region19: #{tpu_custom_call.1} parent=11 // pred_region
          _
        $region20: #{tpu_custom_call.1} parent=11 // pred_fallthru
          _
        // Predicated region
        $region21: #{tpu_custom_call.1} parent=11 // pred_check
          %p224 = pneg %p119
        $region22: #{tpu_custom_call.1} parent=11 // pred_check_branch
          %226 = sbr.rel (%p224) target = $region24
        $region23: #{tpu_custom_call.1} parent=11 // pred_region
          _
        $region24: #{tpu_custom_call.1} parent=11 // pred_fallthru
          _
      $region12: #{tpu_custom_call.1} parent=5 // pred_fallthru
        _
      %p227 = scmp.lt.s32.totalorder %s16, 2
      // Predicated region
      $region25: #{tpu_custom_call.1} parent=5 // pred_check
        %p228 = pneg %p227
      $region26: #{tpu_custom_call.1} parent=5 // pred_check_branch
        %230 = sbr.rel (%p228) target = $region28
      $region27: #{tpu_custom_call.1} parent=5 // pred_region
        // Predicated region
        $region29: #{tpu_custom_call.1} parent=27 // pred_check
          %p231 = pneg %p50
        $region30: #{tpu_custom_call.1} parent=27 // pred_check_branch
          %233 = sbr.rel (%p231) target = $region32
        $region31: #{tpu_custom_call.1} parent=27 // pred_region
          %s234 = smul.u32 16, %s24
          %p235 = scmp.lt.s32.totalorder %s23, 1
          %s236 = scalar_select %p235, %s23, 1
          %p237 = scmp.lt.s32.totalorder %s234, 15
          %s238 = scalar_select %p237, %s234, 15
          %s239 = smul.addr %s236, 16
          %s240 = sadd.s32 %s238, %s239
          %s241 = smul.addr %s240, 8
          %s242 = scalar_lea.vmem %s0, %s241
          %s243 = smul.u32 16, %s24
        $region32: #{tpu_custom_call.1} parent=27 // pred_fallthru
          _
      $region28: #{tpu_custom_call.1} parent=5 // pred_fallthru
        _
      %p244 = scmp.le.s32.totalorder 1, %s16
      %p245 = scmp.lt.s32.totalorder %s16, 3
      %p246 = pnand %p244, %p245
      %p247 = pneg %p246
      // Predicated region
      $region33: #{tpu_custom_call.1} parent=5 // pred_check
        _
      $region34: #{tpu_custom_call.1} parent=5 // pred_check_branch
        %249 = sbr.rel (%p246) target = $region36
      $region35: #{tpu_custom_call.1} parent=5 // pred_region
        %s250 = ssub.s32 %s16, 1
        %s251 = smul.u32 16, %s26
        %p252 = scmp.lt.s32.totalorder %s25, 1
        %s253 = scalar_select %p252, %s25, 1
        %p254 = scmp.lt.s32.totalorder %s251, 15
        %s255 = scalar_select %p254, %s251, 15
        %s256 = smul.addr %s253, 16
        %s257 = sadd.s32 %s255, %s256
        %s258 = smul.addr %s257, 8
        %s259 = scalar_lea.vmem %s0, %s258
        %p260 = pneg %p56
        %p261 = pneg %p53
        %p262 = pneg %p77
        %p263 = pneg %p74
        %p264 = pneg %p98
        %p265 = pneg %p95
        %p266 = pneg %p119
        %p267 = pneg %p116
        %p268 = pneg %p147
        %p269 = pneg %p144
        %s270 = sand.u32 %s134, 1
        %s271 = scalar_lea.sflag [#allocation3], %s270
        %s272 = sand.u32 %s134, 1
        %s273 = smul.addr %s272, 64
        %s274 = scalar_lea.vmem [#allocation2], %s273
        %p275 = pneg %p175
        %p276 = pneg %p172
        %s277 = smul.u32 16, %s26
        %p278 = scmp.lt.s32.totalorder %s25, 1
        %s279 = scalar_select %p278, %s25, 1
        %p280 = scmp.lt.s32.totalorder %s277, 15
        %s281 = scalar_select %p280, %s277, 15
        %s282 = smul.addr %s279, 16
        %s283 = sadd.s32 %s281, %s282
        %s284 = smul.addr %s283, 8
        %s285 = scalar_lea.vmem %s5, %s284
        %p286 = pneg %p203
        %p287 = pneg %p200
        %s288 = smul.u32 16, %s26
        %p289 = scmp.lt.s32.totalorder %s25, 1
        %s290 = scalar_select %p289, %s25, 1
        %p291 = scmp.lt.s32.totalorder %s288, 15
        %s292 = scalar_select %p291, %s288, 15
        %s293 = smul.addr %s290, 16
        %s294 = sadd.s32 %s292, %s293
        %s295 = smul.addr %s294, 8
        %s296 = scalar_lea.vmem %s6, %s295
        %s297 = smul.u32 16, %s26
        %p298 = scmp.lt.s32.totalorder %s25, 1
        %s299 = scalar_select %p298, %s25, 1
        %p300 = scmp.lt.s32.totalorder %s297, 15
        %s301 = scalar_select %p300, %s297, 15
        %s302 = smul.addr %s299, 16
        %s303 = sadd.s32 %s301, %s302
        %s304 = smul.addr %s303, 8
        %s305 = scalar_lea.vmem %s0, %s304
        %s306 = smul.u32 16, %s26
        %s307 = smul.u32 16, %s26
        %s308 = smul.u32 16, %s26
        %p309 = scmp.lt.s32.totalorder %s25, 1
        %s310 = scalar_select %p309, %s25, 1
        %p311 = scmp.lt.s32.totalorder %s308, 15
        %s312 = scalar_select %p311, %s308, 15
        %s313 = smul.addr %s310, 16
        %s314 = sadd.s32 %s312, %s313
        %s315 = smul.addr %s314, 8
        %s316 = scalar_lea.vmem %s5, %s315
        %s317 = smul.u32 16, %s26
        %s318 = smul.u32 16, %s26
        %p319 = scmp.lt.s32.totalorder %s25, 1
        %s320 = scalar_select %p319, %s25, 1
        %p321 = scmp.lt.s32.totalorder %s318, 15
        %s322 = scalar_select %p321, %s318, 15
        %s323 = smul.addr %s320, 16
        %s324 = sadd.s32 %s322, %s323
        %s325 = smul.addr %s324, 8
        %s326 = scalar_lea.vmem %s6, %s325
        %s327 = smul.u32 16, %s26
        %v328 = vld [vmem:[%s305] sm:$0xff]
        %v329 = vld [vmem:[%s305 + $0x8] sm:$0xff]
        %v330 = vld [vmem:[%s305 + $0x10] sm:$0xff]
        %v331 = vld [vmem:[%s305 + $0x18] sm:$0xff]
        %v332 = vld [vmem:[%s305 + $0x20] sm:$0xff]
        %v333 = vld [vmem:[%s305 + $0x28] sm:$0xff]
        %v334 = vld [vmem:[%s305 + $0x30] sm:$0xff]
        %v335 = vld [vmem:[%s305 + $0x38] sm:$0xff]
        %v336 = vld [vmem:[%s305 + $0x40] sm:$0xff]
        %v337 = vld [vmem:[%s305 + $0x48] sm:$0xff]
        %v338 = vld [vmem:[%s305 + $0x50] sm:$0xff]
        %v339 = vld [vmem:[%s305 + $0x58] sm:$0xff]
        %v340 = vld [vmem:[%s305 + $0x60] sm:$0xff]
        %v341 = vld [vmem:[%s305 + $0x68] sm:$0xff]
        %v342 = vld [vmem:[%s305 + $0x70] sm:$0xff]
        %v343 = vld [vmem:[%s305 + $0x78] sm:$0xff]
        %v344 = vld [vmem:[%s1] sm:$0xff]
        %v345 = vld [vmem:[%s1 + $0x8] sm:$0xff]
        %v346 = vld [vmem:[%s1 + $0x10] sm:$0xff]
        %v347 = vld [vmem:[%s1 + $0x18] sm:$0xff]
        %vm348 = vcmask 261120
        %v350 = vsel %vm348, %v328, 0
        %v353 = vsel %vm348, %v329, 0
        %v356 = vsel %vm348, %v330, 0
        %v359 = vsel %vm348, %v331, 0
        %v362 = vsel %vm348, %v332, 0
        %v365 = vsel %vm348, %v333, 0
        %v368 = vsel %vm348, %v334, 0
        %v371 = vsel %vm348, %v335, 0
        %v374 = vsel %vm348, %v336, 0
        %v377 = vsel %vm348, %v337, 0
        %v380 = vsel %vm348, %v338, 0
        %v383 = vsel %vm348, %v339, 0
        %v386 = vsel %vm348, %v340, 0
        %v389 = vsel %vm348, %v341, 0
        %v392 = vsel %vm348, %v342, 0
        %v395 = vsel %vm348, %v343, 0
        %397 = vmatprep.subr.mxu0 0.0
        %398 = vmatpush1.msra.mxu0 %v344
        %399 = vmatprep.subr.mxu0 0.0
        %400 = vmatpush1.msra.mxu0 %v345
        %401 = vmatprep.subr.mxu0 0.0
        %402 = vmatpush1.msra.mxu0 %v346
        %403 = vmatprep.subr.mxu0 0.0
        %404 = vmatpush1.msra.mxu0 %v347
        %405 = vmatprep.subr.mxu0 0.0
        %406 = vmatpush1.msra.mxu0 0.0
        %407 = vmatprep.subr.mxu0 0.0
        %408 = vmatpush1.msra.mxu0 0.0
        %409 = vmatprep.subr.mxu0 0.0
        %410 = vmatpush1.msra.mxu0 0.0
        %411 = vmatprep.subr.mxu0 0.0
        %412 = vmatpush1.msra.mxu0 0.0
        %413 = vmatprep.subr.mxu0 0.0
        %414 = vmatpush1.msra.mxu0 0.0
        %415 = vmatprep.subr.mxu0 0.0
        %416 = vmatpush1.msra.mxu0 0.0
        %417 = vmatprep.subr.mxu0 0.0
        %418 = vmatpush1.msra.mxu0 0.0
        %419 = vmatprep.subr.mxu0 0.0
        %420 = vmatpush1.msra.mxu0 0.0
        %421 = vmatprep.subr.mxu0 0.0
        %422 = vmatpush1.msra.mxu0 0.0
        %423 = vmatprep.subr.mxu0 0.0
        %424 = vmatpush1.msra.mxu0 0.0
        %425 = vmatprep.subr.mxu0 0.0
        %426 = vmatpush1.msra.mxu0 0.0
        %427 = vmatprep.subr.mxu0 0.0
        %428 = vmatpush1.msra.mxu0 0.0
        %429 = vmatprep.subr.mxu0 0.0
        %430 = vmatpush1.msra.mxu0 0.0
        %431 = vmatprep.subr.mxu0 0.0
        %432 = vmatpush1.msra.mxu0 0.0
        %433 = vmatprep.subr.mxu0 0.0
        %434 = vmatpush1.msra.mxu0 0.0
        %435 = vmatprep.subr.mxu0 0.0
        %436 = vmatpush1.msra.mxu0 0.0
        %437 = vmatprep.subr.mxu0 0.0
        %438 = vmatpush1.msra.mxu0 0.0
        %439 = vmatprep.subr.mxu0 0.0
        %440 = vmatpush1.msra.mxu0 0.0
        %441 = vmatprep.subr.mxu0 0.0
        %442 = vmatpush1.msra.mxu0 0.0
        %443 = vmatprep.subr.mxu0 0.0
        %444 = vmatpush1.msra.mxu0 0.0
        %445 = vmatprep.subr.mxu0 0.0
        %446 = vmatpush1.msra.mxu0 0.0
        %447 = vmatprep.subr.mxu0 0.0
        %448 = vmatpush1.msra.mxu0 0.0
        %449 = vmatprep.subr.mxu0 0.0
        %450 = vmatpush1.msra.mxu0 0.0
        %451 = vmatprep.subr.mxu0 0.0
        %452 = vmatpush1.msra.mxu0 0.0
        %453 = vmatprep.subr.mxu0 0.0
        %454 = vmatpush1.msra.mxu0 0.0
        %455 = vmatprep.subr.mxu0 0.0
        %456 = vmatpush1.msra.mxu0 0.0
        %457 = vmatprep.subr.mxu0 0.0
        %458 = vmatpush1.msra.mxu0 0.0
        %459 = vmatprep.subr.mxu0 0.0
        %460 = vmatpush1.msra.mxu0 0.0
        %461 = vmatprep.mubr.f32.mxu0 0.0
        %462 = vmatmul.mubr.f32.gmra.mrb[0].mxu0 %v350
        %v463 = vpop.f32.mrb[0].mxu0
        %v464 = vadd.f32 0.0, %v463
        %v465 = vpop.f32.mrb[0].mxu0
        %466 = vmatprep.mubr.f32.mxu0 0.0
        %467 = vmatmul.mubr.f32.gmra.mrb[0].mxu0 %v353
        %v468 = vpop.f32.mrb[0].mxu0
        %v469 = vadd.f32 0.0, %v468
        %v470 = vpop.f32.mrb[0].mxu0
        %471 = vmatprep.mubr.f32.mxu0 0.0
        %472 = vmatmul.mubr.f32.gmra.mrb[0].mxu0 %v356
        %v473 = vpop.f32.mrb[0].mxu0
        %v474 = vadd.f32 0.0, %v473
        %v475 = vpop.f32.mrb[0].mxu0
        %476 = vmatprep.mubr.f32.mxu0 0.0
        %477 = vmatmul.mubr.f32.gmra.mrb[0].mxu0 %v359
        %v478 = vpop.f32.mrb[0].mxu0
        %v479 = vadd.f32 0.0, %v478
        %v480 = vpop.f32.mrb[0].mxu0
        %481 = vmatprep.mubr.f32.mxu0 0.0
        %482 = vmatmul.mubr.f32.gmra.mrb[0].mxu0 %v362
        %v483 = vpop.f32.mrb[0].mxu0
        %v484 = vadd.f32 0.0, %v483
        %v485 = vpop.f32.mrb[0].mxu0
        %486 = vmatprep.mubr.f32.mxu0 0.0
        %487 = vmatmul.mubr.f32.gmra.mrb[0].mxu0 %v365
        %v488 = vpop.f32.mrb[0].mxu0
        %v489 = vadd.f32 0.0, %v488
        %v490 = vpop.f32.mrb[0].mxu0
        %491 = vmatprep.mubr.f32.mxu0 0.0
        %492 = vmatmul.mubr.f32.gmra.mrb[0].mxu0 %v368
        %v493 = vpop.f32.mrb[0].mxu0
        %v494 = vadd.f32 0.0, %v493
        %v495 = vpop.f32.mrb[0].mxu0
        %496 = vmatprep.mubr.f32.mxu0 0.0
        %497 = vmatmul.mubr.f32.gmra.mrb[0].mxu0 %v371
        %v498 = vpop.f32.mrb[0].mxu0
        %v499 = vadd.f32 0.0, %v498
        %v500 = vpop.f32.mrb[0].mxu0
        %501 = vmatprep.mubr.f32.mxu0 0.0
        %502 = vmatmul.mubr.f32.gmra.mrb[0].mxu0 %v374
        %v503 = vpop.f32.mrb[0].mxu0
        %v504 = vadd.f32 0.0, %v503
        %v505 = vpop.f32.mrb[0].mxu0
        %506 = vmatprep.mubr.f32.mxu0 0.0
        %507 = vmatmul.mubr.f32.gmra.mrb[0].mxu0 %v377
        %v508 = vpop.f32.mrb[0].mxu0
        %v509 = vadd.f32 0.0, %v508
        %v510 = vpop.f32.mrb[0].mxu0
        %511 = vmatprep.mubr.f32.mxu0 0.0
        %512 = vmatmul.mubr.f32.gmra.mrb[0].mxu0 %v380
        %v513 = vpop.f32.mrb[0].mxu0
        %v514 = vadd.f32 0.0, %v513
        %v515 = vpop.f32.mrb[0].mxu0
        %516 = vmatprep.mubr.f32.mxu0 0.0
        %517 = vmatmul.mubr.f32.gmra.mrb[0].mxu0 %v383
        %v518 = vpop.f32.mrb[0].mxu0
        %v519 = vadd.f32 0.0, %v518
        %v520 = vpop.f32.mrb[0].mxu0
        %521 = vmatprep.mubr.f32.mxu0 0.0
        %522 = vmatmul.mubr.f32.gmra.mrb[0].mxu0 %v386
        %v523 = vpop.f32.mrb[0].mxu0
        %v524 = vadd.f32 0.0, %v523
        %v525 = vpop.f32.mrb[0].mxu0
        %526 = vmatprep.mubr.f32.mxu0 0.0
        %527 = vmatmul.mubr.f32.gmra.mrb[0].mxu0 %v389
        %v528 = vpop.f32.mrb[0].mxu0
        %v529 = vadd.f32 0.0, %v528
        %v530 = vpop.f32.mrb[0].mxu0
        %531 = vmatprep.mubr.f32.mxu0 0.0
        %532 = vmatmul.mubr.f32.gmra.mrb[0].mxu0 %v392
        %v533 = vpop.f32.mrb[0].mxu0
        %v534 = vadd.f32 0.0, %v533
        %v535 = vpop.f32.mrb[0].mxu0
        %536 = vmatprep.mubr.f32.mxu0 0.0
        %537 = vmatmul.mubr.f32.gmra.mrb[0].mxu0 %v395
        %v538 = vpop.f32.mrb[0].mxu0
        %v539 = vadd.f32 0.0, %v538
        %v540 = vpop.f32.mrb[0].mxu0
        %541 = vdwg.mxu0
        %v542 = vpack.c.bf16 %v469, %v464
        %v543 = vpack.c.bf16 %v479, %v474
        %v544 = vpack.c.bf16 %v489, %v484
        %v545 = vpack.c.bf16 %v499, %v494
        %v546 = vpack.c.bf16 %v509, %v504
        %v547 = vpack.c.bf16 %v519, %v514
        %v548 = vpack.c.bf16 %v529, %v524
        %v549 = vpack.c.bf16 %v539, %v534
        %v558 = vunpack.c.l.b16 %v542
        %v559 = vunpack.c.h.b16 %v542
        %v560 = vunpack.c.l.b16 %v543
        %v561 = vunpack.c.h.b16 %v543
        %v562 = vunpack.c.l.b16 %v544
        %v563 = vunpack.c.h.b16 %v544
        %v564 = vunpack.c.l.b16 %v545
        %v565 = vunpack.c.h.b16 %v545
        %v566 = vunpack.c.l.b16 %v546
        %v567 = vunpack.c.h.b16 %v546
        %v568 = vunpack.c.l.b16 %v547
        %v569 = vunpack.c.h.b16 %v547
        %v570 = vunpack.c.l.b16 %v548
        %v571 = vunpack.c.h.b16 %v548
        %v572 = vunpack.c.l.b16 %v549
        %v573 = vunpack.c.h.b16 %v549
        %v574 = vpack.c.b16 %v558, %v558
        %v575 = vpack.c.b16 %v559, %v559
        %v576 = vpack.c.b16 %v560, %v560
        %v577 = vpack.c.b16 %v561, %v561
        %v578 = vpack.c.b16 %v562, %v562
        %v579 = vpack.c.b16 %v563, %v563
        %v580 = vpack.c.b16 %v564, %v564
        %v581 = vpack.c.b16 %v565, %v565
        %v582 = vpack.c.b16 %v566, %v566
        %v583 = vpack.c.b16 %v567, %v567
        %v584 = vpack.c.b16 %v568, %v568
        %v585 = vpack.c.b16 %v569, %v569
        %v586 = vpack.c.b16 %v570, %v570
        %v587 = vpack.c.b16 %v571, %v571
        %v588 = vpack.c.b16 %v572, %v572
        %v589 = vpack.c.b16 %v573, %v573
        %606 = vst [vmem:[%s274] sm:$0xf] %v574
        %607 = vst [vmem:[%s274 + $0x4] sm:$0xf] %v575
        %608 = vst [vmem:[%s274 + $0x8] sm:$0xf] %v576
        %609 = vst [vmem:[%s274 + $0xc] sm:$0xf] %v577
        %610 = vst [vmem:[%s274 + $0x10] sm:$0xf] %v578
        %611 = vst [vmem:[%s274 + $0x14] sm:$0xf] %v579
        %612 = vst [vmem:[%s274 + $0x18] sm:$0xf] %v580
        %613 = vst [vmem:[%s274 + $0x1c] sm:$0xf] %v581
        %614 = vst [vmem:[%s274 + $0x20] sm:$0xf] %v582
        %615 = vst [vmem:[%s274 + $0x24] sm:$0xf] %v583
        %616 = vst [vmem:[%s274 + $0x28] sm:$0xf] %v584
        %617 = vst [vmem:[%s274 + $0x2c] sm:$0xf] %v585
        %618 = vst [vmem:[%s274 + $0x30] sm:$0xf] %v586
        %619 = vst [vmem:[%s274 + $0x34] sm:$0xf] %v587
        %620 = vst [vmem:[%s274 + $0x38] sm:$0xf] %v588
        %621 = vst [vmem:[%s274 + $0x3c] sm:$0xf] %v589
        %v622 = vld [vmem:[%s2] sm:$0xff]
        %v623 = vld [vmem:[%s2 + $0x8] sm:$0xff]
        %v624 = vld [vmem:[%s2 + $0x10] sm:$0xff]
        %v625 = vld [vmem:[%s2 + $0x18] sm:$0xff]
        %v626 = vld [vmem:[%s2 + $0x20] sm:$0xff]
        %v627 = vld [vmem:[%s2 + $0x28] sm:$0xff]
        %v628 = vld [vmem:[%s2 + $0x30] sm:$0xff]
        %v629 = vld [vmem:[%s2 + $0x38] sm:$0xff]
        %v630 = vld [vmem:[%s2 + $0x40] sm:$0xff]
        %v631 = vld [vmem:[%s2 + $0x48] sm:$0xff]
        %v632 = vld [vmem:[%s2 + $0x50] sm:$0xff]
        %v633 = vld [vmem:[%s2 + $0x58] sm:$0xff]
        %v634 = vld [vmem:[%s2 + $0x60] sm:$0xff]
        %v635 = vld [vmem:[%s2 + $0x68] sm:$0xff]
        %v636 = vld [vmem:[%s2 + $0x70] sm:$0xff]
        %v637 = vld [vmem:[%s2 + $0x78] sm:$0xff]
        %638 = vmatprep.subr.mxu0 0.0
        %639 = vmatpush1.msra.mxu0 %v622
        %640 = vmatprep.subr.mxu0 0.0
        %641 = vmatpush1.msra.mxu0 %v623
        %642 = vmatprep.subr.mxu0 0.0
        %643 = vmatpush1.msra.mxu0 %v624
        %644 = vmatprep.subr.mxu0 0.0
        %645 = vmatpush1.msra.mxu0 %v625
        %646 = vmatprep.subr.mxu0 0.0
        %647 = vmatpush1.msra.mxu0 %v626
        %648 = vmatprep.subr.mxu0 0.0
        %649 = vmatpush1.msra.mxu0 %v627
        %650 = vmatprep.subr.mxu0 0.0
        %651 = vmatpush1.msra.mxu0 %v628
        %652 = vmatprep.subr.mxu0 0.0
        %653 = vmatpush1.msra.mxu0 %v629
        %654 = vmatprep.subr.mxu0 0.0
        %655 = vmatpush1.msra.mxu0 %v630
        %656 = vmatprep.subr.mxu0 0.0
        %657 = vmatpush1.msra.mxu0 %v631
        %658 = vmatprep.subr.mxu0 0.0
        %659 = vmatpush1.msra.mxu0 %v632
        %660 = vmatprep.subr.mxu0 0.0
        %661 = vmatpush1.msra.mxu0 %v633
        %662 = vmatprep.subr.mxu0 0.0
        %663 = vmatpush1.msra.mxu0 %v634
        %664 = vmatprep.subr.mxu0 0.0
        %665 = vmatpush1.msra.mxu0 %v635
        %666 = vmatprep.subr.mxu0 0.0
        %667 = vmatpush1.msra.mxu0 %v636
        %668 = vmatprep.subr.mxu0 0.0
        %669 = vmatpush1.msra.mxu0 %v637
        %670 = vmatprep.subr.mxu0 0.0
        %671 = vmatpush1.msra.mxu0 0.0
        %672 = vmatprep.subr.mxu0 0.0
        %673 = vmatpush1.msra.mxu0 0.0
        %674 = vmatprep.subr.mxu0 0.0
        %675 = vmatpush1.msra.mxu0 0.0
        %676 = vmatprep.subr.mxu0 0.0
        %677 = vmatpush1.msra.mxu0 0.0
        %678 = vmatprep.subr.mxu0 0.0
        %679 = vmatpush1.msra.mxu0 0.0
        %680 = vmatprep.subr.mxu0 0.0
        %681 = vmatpush1.msra.mxu0 0.0
        %682 = vmatprep.subr.mxu0 0.0
        %683 = vmatpush1.msra.mxu0 0.0
        %684 = vmatprep.subr.mxu0 0.0
        %685 = vmatpush1.msra.mxu0 0.0
        %686 = vmatprep.subr.mxu0 0.0
        %687 = vmatpush1.msra.mxu0 0.0
        %688 = vmatprep.subr.mxu0 0.0
        %689 = vmatpush1.msra.mxu0 0.0
        %690 = vmatprep.subr.mxu0 0.0
        %691 = vmatpush1.msra.mxu0 0.0
        %692 = vmatprep.subr.mxu0 0.0
        %693 = vmatpush1.msra.mxu0 0.0
        %694 = vmatprep.subr.mxu0 0.0
        %695 = vmatpush1.msra.mxu0 0.0
        %696 = vmatprep.subr.mxu0 0.0
        %697 = vmatpush1.msra.mxu0 0.0
        %698 = vmatprep.subr.mxu0 0.0
        %699 = vmatpush1.msra.mxu0 0.0
        %700 = vmatprep.subr.mxu0 0.0
        %701 = vmatpush1.msra.mxu0 0.0
        %702 = vmatprep.mubr.f32.mxu0 0.0
        %703 = vmatmul.mubr.f32.gmra.mrb[0].mxu0 %v464
        %v704 = vpop.f32.mrb[0].mxu0
        %v705 = vadd.f32 0.0, %v704
        %v706 = vpop.f32.mrb[0].mxu0
        %707 = vmatprep.mubr.f32.mxu0 0.0
        %708 = vmatmul.mubr.f32.gmra.mrb[0].mxu0 %v469
        %v709 = vpop.f32.mrb[0].mxu0
        %v710 = vadd.f32 0.0, %v709
        %v711 = vpop.f32.mrb[0].mxu0
        %712 = vmatprep.mubr.f32.mxu0 0.0
        %713 = vmatmul.mubr.f32.gmra.mrb[0].mxu0 %v474
        %v714 = vpop.f32.mrb[0].mxu0
        %v715 = vadd.f32 0.0, %v714
        %v716 = vpop.f32.mrb[0].mxu0
        %717 = vmatprep.mubr.f32.mxu0 0.0
        %718 = vmatmul.mubr.f32.gmra.mrb[0].mxu0 %v479
        %v719 = vpop.f32.mrb[0].mxu0
        %v720 = vadd.f32 0.0, %v719
        %v721 = vpop.f32.mrb[0].mxu0
        %722 = vmatprep.mubr.f32.mxu0 0.0
        %723 = vmatmul.mubr.f32.gmra.mrb[0].mxu0 %v484
        %v724 = vpop.f32.mrb[0].mxu0
        %v725 = vadd.f32 0.0, %v724
        %v726 = vpop.f32.mrb[0].mxu0
        %727 = vmatprep.mubr.f32.mxu0 0.0
        %728 = vmatmul.mubr.f32.gmra.mrb[0].mxu0 %v489
        %v729 = vpop.f32.mrb[0].mxu0
        %v730 = vadd.f32 0.0, %v729
        %v731 = vpop.f32.mrb[0].mxu0
        %732 = vmatprep.mubr.f32.mxu0 0.0
        %733 = vmatmul.mubr.f32.gmra.mrb[0].mxu0 %v494
        %v734 = vpop.f32.mrb[0].mxu0
        %v735 = vadd.f32 0.0, %v734
        %v736 = vpop.f32.mrb[0].mxu0
        %737 = vmatprep.mubr.f32.mxu0 0.0
        %738 = vmatmul.mubr.f32.gmra.mrb[0].mxu0 %v499
        %v739 = vpop.f32.mrb[0].mxu0
        %v740 = vadd.f32 0.0, %v739
        %v741 = vpop.f32.mrb[0].mxu0
        %742 = vmatprep.mubr.f32.mxu0 0.0
        %743 = vmatmul.mubr.f32.gmra.mrb[0].mxu0 %v504
        %v744 = vpop.f32.mrb[0].mxu0
        %v745 = vadd.f32 0.0, %v744
        %v746 = vpop.f32.mrb[0].mxu0
        %747 = vmatprep.mubr.f32.mxu0 0.0
        %748 = vmatmul.mubr.f32.gmra.mrb[0].mxu0 %v509
        %v749 = vpop.f32.mrb[0].mxu0
        %v750 = vadd.f32 0.0, %v749
        %v751 = vpop.f32.mrb[0].mxu0
        %752 = vmatprep.mubr.f32.mxu0 0.0
        %753 = vmatmul.mubr.f32.gmra.mrb[0].mxu0 %v514
        %v754 = vpop.f32.mrb[0].mxu0
        %v755 = vadd.f32 0.0, %v754
        %v756 = vpop.f32.mrb[0].mxu0
        %757 = vmatprep.mubr.f32.mxu0 0.0
        %758 = vmatmul.mubr.f32.gmra.mrb[0].mxu0 %v519
        %v759 = vpop.f32.mrb[0].mxu0
        %v760 = vadd.f32 0.0, %v759
        %v761 = vpop.f32.mrb[0].mxu0
        %762 = vmatprep.mubr.f32.mxu0 0.0
        %763 = vmatmul.mubr.f32.gmra.mrb[0].mxu0 %v524
        %v764 = vpop.f32.mrb[0].mxu0
        %v765 = vadd.f32 0.0, %v764
        %v766 = vpop.f32.mrb[0].mxu0
        %767 = vmatprep.mubr.f32.mxu0 0.0
        %768 = vmatmul.mubr.f32.gmra.mrb[0].mxu0 %v529
        %v769 = vpop.f32.mrb[0].mxu0
        %v770 = vadd.f32 0.0, %v769
        %v771 = vpop.f32.mrb[0].mxu0
        %772 = vmatprep.mubr.f32.mxu0 0.0
        %773 = vmatmul.mubr.f32.gmra.mrb[0].mxu0 %v534
        %v774 = vpop.f32.mrb[0].mxu0
        %v775 = vadd.f32 0.0, %v774
        %v776 = vpop.f32.mrb[0].mxu0
        %777 = vmatprep.mubr.f32.mxu0 0.0
        %778 = vmatmul.mubr.f32.gmra.mrb[0].mxu0 %v539
        %v779 = vpop.f32.mrb[0].mxu0
        %v780 = vadd.f32 0.0, %v779
        %v781 = vpop.f32.mrb[0].mxu0
        %782 = vdwg.mxu0
        %vm783 = vcmask 7168
        %784 = vst.msk [vmem:[%s316] sm:$0xff] %vm783, %v705
        %785 = vst.msk [vmem:[%s316 + $0x8] sm:$0xff] %vm783, %v710
        %786 = vst.msk [vmem:[%s316 + $0x10] sm:$0xff] %vm783, %v715
        %787 = vst.msk [vmem:[%s316 + $0x18] sm:$0xff] %vm783, %v720
        %788 = vst.msk [vmem:[%s316 + $0x20] sm:$0xff] %vm783, %v725
        %789 = vst.msk [vmem:[%s316 + $0x28] sm:$0xff] %vm783, %v730
        %790 = vst.msk [vmem:[%s316 + $0x30] sm:$0xff] %vm783, %v735
        %791 = vst.msk [vmem:[%s316 + $0x38] sm:$0xff] %vm783, %v740
        %792 = vst.msk [vmem:[%s316 + $0x40] sm:$0xff] %vm783, %v745
        %793 = vst.msk [vmem:[%s316 + $0x48] sm:$0xff] %vm783, %v750
        %794 = vst.msk [vmem:[%s316 + $0x50] sm:$0xff] %vm783, %v755
        %795 = vst.msk [vmem:[%s316 + $0x58] sm:$0xff] %vm783, %v760
        %796 = vst.msk [vmem:[%s316 + $0x60] sm:$0xff] %vm783, %v765
        %797 = vst.msk [vmem:[%s316 + $0x68] sm:$0xff] %vm783, %v770
        %798 = vst.msk [vmem:[%s316 + $0x70] sm:$0xff] %vm783, %v775
        %799 = vst.msk [vmem:[%s316 + $0x78] sm:$0xff] %vm783, %v780
        %v800 = vld [vmem:[%s3] sm:$0xff]
        %v801 = vld [vmem:[%s3 + $0x8] sm:$0xff]
        %v802 = vld [vmem:[%s3 + $0x10] sm:$0xff]
        %v803 = vld [vmem:[%s3 + $0x18] sm:$0xff]
        %v804 = vld [vmem:[%s3 + $0x20] sm:$0xff]
        %v805 = vld [vmem:[%s3 + $0x28] sm:$0xff]
        %v806 = vld [vmem:[%s3 + $0x30] sm:$0xff]
        %v807 = vld [vmem:[%s3 + $0x38] sm:$0xff]
        %v808 = vld [vmem:[%s3 + $0x40] sm:$0xff]
        %v809 = vld [vmem:[%s3 + $0x48] sm:$0xff]
        %v810 = vld [vmem:[%s3 + $0x50] sm:$0xff]
        %v811 = vld [vmem:[%s3 + $0x58] sm:$0xff]
        %v812 = vld [vmem:[%s3 + $0x60] sm:$0xff]
        %v813 = vld [vmem:[%s3 + $0x68] sm:$0xff]
        %v814 = vld [vmem:[%s3 + $0x70] sm:$0xff]
        %v815 = vld [vmem:[%s3 + $0x78] sm:$0xff]
        %816 = vmatprep.subr.mxu0 0.0
        %817 = vmatpush1.msra.mxu0 %v800
        %818 = vmatprep.subr.mxu0 0.0
        %819 = vmatpush1.msra.mxu0 %v801
        %820 = vmatprep.subr.mxu0 0.0
        %821 = vmatpush1.msra.mxu0 %v802
        %822 = vmatprep.subr.mxu0 0.0
        %823 = vmatpush1.msra.mxu0 %v803
        %824 = vmatprep.subr.mxu0 0.0
        %825 = vmatpush1.msra.mxu0 %v804
        %826 = vmatprep.subr.mxu0 0.0
        %827 = vmatpush1.msra.mxu0 %v805
        %828 = vmatprep.subr.mxu0 0.0
        %829 = vmatpush1.msra.mxu0 %v806
        %830 = vmatprep.subr.mxu0 0.0
        %831 = vmatpush1.msra.mxu0 %v807
        %832 = vmatprep.subr.mxu0 0.0
        %833 = vmatpush1.msra.mxu0 %v808
        %834 = vmatprep.subr.mxu0 0.0
        %835 = vmatpush1.msra.mxu0 %v809
        %836 = vmatprep.subr.mxu0 0.0
        %837 = vmatpush1.msra.mxu0 %v810
        %838 = vmatprep.subr.mxu0 0.0
        %839 = vmatpush1.msra.mxu0 %v811
        %840 = vmatprep.subr.mxu0 0.0
        %841 = vmatpush1.msra.mxu0 %v812
        %842 = vmatprep.subr.mxu0 0.0
        %843 = vmatpush1.msra.mxu0 %v813
        %844 = vmatprep.subr.mxu0 0.0
        %845 = vmatpush1.msra.mxu0 %v814
        %846 = vmatprep.subr.mxu0 0.0
        %847 = vmatpush1.msra.mxu0 %v815
        %848 = vmatprep.subr.mxu0 0.0
        %849 = vmatpush1.msra.mxu0 0.0
        %850 = vmatprep.subr.mxu0 0.0
        %851 = vmatpush1.msra.mxu0 0.0
        %852 = vmatprep.subr.mxu0 0.0
        %853 = vmatpush1.msra.mxu0 0.0
        %854 = vmatprep.subr.mxu0 0.0
        %855 = vmatpush1.msra.mxu0 0.0
        %856 = vmatprep.subr.mxu0 0.0
        %857 = vmatpush1.msra.mxu0 0.0
        %858 = vmatprep.subr.mxu0 0.0
        %859 = vmatpush1.msra.mxu0 0.0
        %860 = vmatprep.subr.mxu0 0.0
        %861 = vmatpush1.msra.mxu0 0.0
        %862 = vmatprep.subr.mxu0 0.0
        %863 = vmatpush1.msra.mxu0 0.0
        %864 = vmatprep.subr.mxu0 0.0
        %865 = vmatpush1.msra.mxu0 0.0
        %866 = vmatprep.subr.mxu0 0.0
        %867 = vmatpush1.msra.mxu0 0.0
        %868 = vmatprep.subr.mxu0 0.0
        %869 = vmatpush1.msra.mxu0 0.0
        %870 = vmatprep.subr.mxu0 0.0
        %871 = vmatpush1.msra.mxu0 0.0
        %872 = vmatprep.subr.mxu0 0.0
        %873 = vmatpush1.msra.mxu0 0.0
        %874 = vmatprep.subr.mxu0 0.0
        %875 = vmatpush1.msra.mxu0 0.0
        %876 = vmatprep.subr.mxu0 0.0
        %877 = vmatpush1.msra.mxu0 0.0
        %878 = vmatprep.subr.mxu0 0.0
        %879 = vmatpush1.msra.mxu0 0.0
        %880 = vmatprep.mubr.f32.mxu0 0.0
        %881 = vmatmul.mubr.f32.gmra.mrb[0].mxu0 %v464
        %v882 = vpop.f32.mrb[0].mxu0
        %v883 = vadd.f32 0.0, %v882
        %v884 = vpop.f32.mrb[0].mxu0
        %885 = vmatprep.mubr.f32.mxu0 0.0
        %886 = vmatmul.mubr.f32.gmra.mrb[0].mxu0 %v469
        %v887 = vpop.f32.mrb[0].mxu0
        %v888 = vadd.f32 0.0, %v887
        %v889 = vpop.f32.mrb[0].mxu0
        %890 = vmatprep.mubr.f32.mxu0 0.0
        %891 = vmatmul.mubr.f32.gmra.mrb[0].mxu0 %v474
        %v892 = vpop.f32.mrb[0].mxu0
        %v893 = vadd.f32 0.0, %v892
        %v894 = vpop.f32.mrb[0].mxu0
        %895 = vmatprep.mubr.f32.mxu0 0.0
        %896 = vmatmul.mubr.f32.gmra.mrb[0].mxu0 %v479
        %v897 = vpop.f32.mrb[0].mxu0
        %v898 = vadd.f32 0.0, %v897
        %v899 = vpop.f32.mrb[0].mxu0
        %900 = vmatprep.mubr.f32.mxu0 0.0
        %901 = vmatmul.mubr.f32.gmra.mrb[0].mxu0 %v484
        %v902 = vpop.f32.mrb[0].mxu0
        %v903 = vadd.f32 0.0, %v902
        %v904 = vpop.f32.mrb[0].mxu0
        %905 = vmatprep.mubr.f32.mxu0 0.0
        %906 = vmatmul.mubr.f32.gmra.mrb[0].mxu0 %v489
        %v907 = vpop.f32.mrb[0].mxu0
        %v908 = vadd.f32 0.0, %v907
        %v909 = vpop.f32.mrb[0].mxu0
        %910 = vmatprep.mubr.f32.mxu0 0.0
        %911 = vmatmul.mubr.f32.gmra.mrb[0].mxu0 %v494
        %v912 = vpop.f32.mrb[0].mxu0
        %v913 = vadd.f32 0.0, %v912
        %v914 = vpop.f32.mrb[0].mxu0
        %915 = vmatprep.mubr.f32.mxu0 0.0
        %916 = vmatmul.mubr.f32.gmra.mrb[0].mxu0 %v499
        %v917 = vpop.f32.mrb[0].mxu0
        %v918 = vadd.f32 0.0, %v917
        %v919 = vpop.f32.mrb[0].mxu0
        %920 = vmatprep.mubr.f32.mxu0 0.0
        %921 = vmatmul.mubr.f32.gmra.mrb[0].mxu0 %v504
        %v922 = vpop.f32.mrb[0].mxu0
        %v923 = vadd.f32 0.0, %v922
        %v924 = vpop.f32.mrb[0].mxu0
        %925 = vmatprep.mubr.f32.mxu0 0.0
        %926 = vmatmul.mubr.f32.gmra.mrb[0].mxu0 %v509
        %v927 = vpop.f32.mrb[0].mxu0
        %v928 = vadd.f32 0.0, %v927
        %v929 = vpop.f32.mrb[0].mxu0
        %930 = vmatprep.mubr.f32.mxu0 0.0
        %931 = vmatmul.mubr.f32.gmra.mrb[0].mxu0 %v514
        %v932 = vpop.f32.mrb[0].mxu0
        %v933 = vadd.f32 0.0, %v932
        %v934 = vpop.f32.mrb[0].mxu0
        %935 = vmatprep.mubr.f32.mxu0 0.0
        %936 = vmatmul.mubr.f32.gmra.mrb[0].mxu0 %v519
        %v937 = vpop.f32.mrb[0].mxu0
        %v938 = vadd.f32 0.0, %v937
        %v939 = vpop.f32.mrb[0].mxu0
        %940 = vmatprep.mubr.f32.mxu0 0.0
        %941 = vmatmul.mubr.f32.gmra.mrb[0].mxu0 %v524
        %v942 = vpop.f32.mrb[0].mxu0
        %v943 = vadd.f32 0.0, %v942
        %v944 = vpop.f32.mrb[0].mxu0
        %945 = vmatprep.mubr.f32.mxu0 0.0
        %946 = vmatmul.mubr.f32.gmra.mrb[0].mxu0 %v529
        %v947 = vpop.f32.mrb[0].mxu0
        %v948 = vadd.f32 0.0, %v947
        %v949 = vpop.f32.mrb[0].mxu0
        %950 = vmatprep.mubr.f32.mxu0 0.0
        %951 = vmatmul.mubr.f32.gmra.mrb[0].mxu0 %v534
        %v952 = vpop.f32.mrb[0].mxu0
        %v953 = vadd.f32 0.0, %v952
        %v954 = vpop.f32.mrb[0].mxu0
        %955 = vmatprep.mubr.f32.mxu0 0.0
        %956 = vmatmul.mubr.f32.gmra.mrb[0].mxu0 %v539
        %v957 = vpop.f32.mrb[0].mxu0
        %v958 = vadd.f32 0.0, %v957
        %v959 = vpop.f32.mrb[0].mxu0
        %960 = vdwg.mxu0
        %961 = vst.msk [vmem:[%s326] sm:$0xff] %vm783, %v883
        %962 = vst.msk [vmem:[%s326 + $0x8] sm:$0xff] %vm783, %v888
        %963 = vst.msk [vmem:[%s326 + $0x10] sm:$0xff] %vm783, %v893
        %964 = vst.msk [vmem:[%s326 + $0x18] sm:$0xff] %vm783, %v898
        %965 = vst.msk [vmem:[%s326 + $0x20] sm:$0xff] %vm783, %v903
        %966 = vst.msk [vmem:[%s326 + $0x28] sm:$0xff] %vm783, %v908
        %967 = vst.msk [vmem:[%s326 + $0x30] sm:$0xff] %vm783, %v913
        %968 = vst.msk [vmem:[%s326 + $0x38] sm:$0xff] %vm783, %v918
        %969 = vst.msk [vmem:[%s326 + $0x40] sm:$0xff] %vm783, %v923
        %970 = vst.msk [vmem:[%s326 + $0x48] sm:$0xff] %vm783, %v928
        %971 = vst.msk [vmem:[%s326 + $0x50] sm:$0xff] %vm783, %v933
        %972 = vst.msk [vmem:[%s326 + $0x58] sm:$0xff] %vm783, %v938
        %973 = vst.msk [vmem:[%s326 + $0x60] sm:$0xff] %vm783, %v943
        %974 = vst.msk [vmem:[%s326 + $0x68] sm:$0xff] %vm783, %v948
        %975 = vst.msk [vmem:[%s326 + $0x70] sm:$0xff] %vm783, %v953
        %976 = vst.msk [vmem:[%s326 + $0x78] sm:$0xff] %vm783, %v958
        %s977 = sand.u32 %s134, 1
        %s978 = scalar_lea.sflag [#allocation3], %s977
        %s979 = sand.u32 %s134, 1
        %s980 = smul.addr %s979, 64
        %s981 = scalar_lea.vmem [#allocation2], %s980
        %s982 = smul.u32 16, %s26
        %p983 = scmp.lt.s32.totalorder %s25, 1
        %s984 = scalar_select %p983, %s25, 1
        %p985 = scmp.lt.s32.totalorder %s982, 15
        %s986 = scalar_select %p985, %s982, 15
        %s987 = smul.addr %s984, 16
        %s988 = sadd.s32 %s986, %s987
        %s989 = smul.addr %s988, 8
        %s990 = scalar_lea.vmem %s5, %s989
        %s991 = smul.u32 16, %s26
        %p992 = scmp.lt.s32.totalorder %s25, 1
        %s993 = scalar_select %p992, %s25, 1
        %p994 = scmp.lt.s32.totalorder %s991, 15
        %s995 = scalar_select %p994, %s991, 15
        %s996 = smul.addr %s993, 16
        %s997 = sadd.s32 %s995, %s996
        %s998 = smul.addr %s997, 8
        %s999 = scalar_lea.vmem %s6, %s998
        // Predicated region
        $region37: #{tpu_custom_call.1} parent=35 // pred_check
          %p1000 = pneg %p144
        $region38: #{tpu_custom_call.1} parent=35 // pred_check_branch
          %1002 = sbr.rel (%p1000) target = $region40
        $region39: #{tpu_custom_call.1} parent=35 // pred_region
          %s1003 = smul.u32 16, %s26
          %s1005 = ssub.s32 1024, 1024
          %1006 = vsyncadd %s978, %s1005
          %s1007 = smul.addr %s25, 16
          %s1008 = sadd.s32 %s1003, %s1007
          %s1009 = smul.addr %s1008, 64
          %s1010 = scalar_lea.hbm %s4, %s1009
          %s1011 = sshll.u32 %s981, 4
          %s1012 = int_to_ptr.vmem [resolvable:$true] %s1011
          %1017 = dma.vmem_to_hbm [thread:$0]  %s1012, 1024, %s1010, %s978, 64, 64, 4
        $region40: #{tpu_custom_call.1} parent=35 // pred_fallthru
          _
        // Predicated region
        $region41: #{tpu_custom_call.1} parent=35 // pred_check
          %p1018 = pneg %p172
        $region42: #{tpu_custom_call.1} parent=35 // pred_check_branch
          %1020 = sbr.rel (%p1018) target = $region44
        $region43: #{tpu_custom_call.1} parent=35 // pred_region
          %s1021 = smul.u32 16, %s26
        $region44: #{tpu_custom_call.1} parent=35 // pred_fallthru
          _
        // Predicated region
        $region45: #{tpu_custom_call.1} parent=35 // pred_check
          %p1022 = pneg %p200
        $region46: #{tpu_custom_call.1} parent=35 // pred_check_branch
          %1024 = sbr.rel (%p1022) target = $region48
        $region47: #{tpu_custom_call.1} parent=35 // pred_region
          %s1025 = smul.u32 16, %s26
        $region48: #{tpu_custom_call.1} parent=35 // pred_fallthru
          _
      $region36: #{tpu_custom_call.1} parent=5 // pred_fallthru
        _
      %p1026 = scmp.le.s32.totalorder 2, %s16
      // Predicated region
      $region49: #{tpu_custom_call.1} parent=5 // pred_check
        %p1027 = pneg %p1026
      $region50: #{tpu_custom_call.1} parent=5 // pred_check_branch
        %1029 = sbr.rel (%p1027) target = $region52
      $region51: #{tpu_custom_call.1} parent=5 // pred_region
        %s1030 = ssub.s32 %s16, 2
        // Predicated region
        $region53: #{tpu_custom_call.1} parent=51 // pred_check
          %p1031 = pneg %p150
        $region54: #{tpu_custom_call.1} parent=51 // pred_check_branch
          %1033 = sbr.rel (%p1031) target = $region56
        $region55: #{tpu_custom_call.1} parent=51 // pred_region
          %s1034 = sand.u32 %s135, 1
          %s1035 = scalar_lea.sflag [#allocation3], %s1034
          %s1036 = sand.u32 %s135, 1
          %s1037 = smul.addr %s1036, 64
          %s1038 = scalar_lea.vmem [#allocation2], %s1037
          %1039 = dma.done %s1035, 1024
        $region56: #{tpu_custom_call.1} parent=51 // pred_fallthru
          _
        // Predicated region
        $region57: #{tpu_custom_call.1} parent=51 // pred_check
          %p1040 = pneg %p178
        $region58: #{tpu_custom_call.1} parent=51 // pred_check_branch
          %1042 = sbr.rel (%p1040) target = $region60
        $region59: #{tpu_custom_call.1} parent=51 // pred_region
          %s1043 = smul.u32 16, %s28
          %p1044 = scmp.lt.s32.totalorder %s27, 1
          %s1045 = scalar_select %p1044, %s27, 1
          %p1046 = scmp.lt.s32.totalorder %s1043, 15
          %s1047 = scalar_select %p1046, %s1043, 15
          %s1048 = smul.addr %s1045, 16
          %s1049 = sadd.s32 %s1047, %s1048
          %s1050 = smul.addr %s1049, 8
          %s1051 = scalar_lea.vmem %s5, %s1050
        $region60: #{tpu_custom_call.1} parent=51 // pred_fallthru
          _
        // Predicated region
        $region61: #{tpu_custom_call.1} parent=51 // pred_check
          %p1052 = pneg %p206
        $region62: #{tpu_custom_call.1} parent=51 // pred_check_branch
          %1054 = sbr.rel (%p1052) target = $region64
        $region63: #{tpu_custom_call.1} parent=51 // pred_region
          %s1055 = smul.u32 16, %s28
          %p1056 = scmp.lt.s32.totalorder %s27, 1
          %s1057 = scalar_select %p1056, %s27, 1
          %p1058 = scmp.lt.s32.totalorder %s1055, 15
          %s1059 = scalar_select %p1058, %s1055, 15
          %s1060 = smul.addr %s1057, 16
          %s1061 = sadd.s32 %s1059, %s1060
          %s1062 = smul.addr %s1061, 8
          %s1063 = scalar_lea.vmem %s6, %s1062
        $region64: #{tpu_custom_call.1} parent=51 // pred_fallthru
          _
      $region52: #{tpu_custom_call.1} parent=5 // pred_fallthru
        _
    $region6: #{tpu_custom_call.1} parent=1 // loop_footer
      %s20 = sadd.s32 1, %s16
    $region7: #{tpu_custom_call.1} parent=1 // loop_footer_branch
      %15 = sbr.rel target = $region3
    $region8: #{tpu_custom_call.1} parent=1 // loop_exit
      _
    %1064 = vsyncpa [#allocation3], 1
    %s1065 = scalar_lea.sflag [#allocation3], 1
    %1066 = vsyncpa %s1065, 1

</llo_original>
